<compile_context>
chip_gen: v7x
topology: tpu7x:2x2x1
jax: 0.10.0
libtpu: 0.0.40
codegen_flags: <defaults>
</compile_context>

<pallas_src>
import jax
import jax.numpy as jnp
from jax.experimental import pallas as pl
from jax.experimental.pallas import tpu as pltpu


def _swish_kernel(x_ref, o_ref):
    x = x_ref[...]
    # Native-dtype compute (bf16 stays bf16 on v6e/v7x; f32 stays f32).
    # 1/(1+exp(-x)) matches torch.mul(x.sigmoid(), x) exactly, including the
    # x=-inf -> NaN edge case PyTorch itself produces.
    one = jnp.asarray(1.0, dtype=x.dtype)
    sig = one / (one + jnp.exp(-x))
    o_ref[...] = (x * sig).astype(o_ref.dtype)


def swish(x):
    """Elementwise x * sigmoid(x). Accepts any shape (e.g. NCHW)."""
    orig_shape = x.shape
    dtype = x.dtype
    n = x.size
    itemsize = jnp.dtype(dtype).itemsize

    LANE = 128   # lane width of a vreg
    SUB = 8      # sublane granularity (f32); multiples of 8 keep stores unmasked

    # --- choose a lane-dense slab: wide last dim for long store bursts -------
    if n >= 2048 * SUB:
        cols = 2048
    elif n >= 512 * SUB:
        cols = 512
    else:
        cols = LANE

    # --- block size: ~4 MiB per block, (8,128)-aligned -----------------------
    target_block_bytes = 4 * 1024 * 1024
    row_tile = max(SUB, (target_block_bytes // (cols * itemsize)) // SUB * SUB)

    rows_min = pl.cdiv(n, cols)
    rows_aligned = pl.cdiv(rows_min, SUB) * SUB
    row_tile = min(row_tile, rows_aligned)           # still a multiple of SUB
    rows = pl.cdiv(rows_aligned, row_tile) * row_tile  # whole number of blocks
    n_pad = rows * cols

    # --- pad flat array to a whole number of blocks (no single-block path) ---
    x_flat = x.reshape(-1)
    if n_pad != n:
        x_flat = jnp.pad(x_flat, (0, n_pad - n))
    x2d = x_flat.reshape(rows, cols)

    grid = (rows // row_tile,)

    block_bytes = row_tile * cols * itemsize
    # in + out, double-buffered, plus headroom; raises v5e's 16 MiB scoped
    # default, stays within v7x's 64 MiB physical VMEM.
    vmem_limit = int(max(32 * 1024 * 1024, 6 * block_bytes))

    out2d = pl.pallas_call(
        _swish_kernel,
        out_shape=jax.ShapeDtypeStruct((rows, cols), dtype),
        grid_spec=pltpu.PrefetchScalarGridSpec(
            num_scalar_prefetch=0,
            grid=grid,
            in_specs=[pl.BlockSpec((row_tile, cols), lambda i: (i, 0))],
            out_specs=pl.BlockSpec((row_tile, cols), lambda i: (i, 0)),
        ),
        compiler_params=pltpu.CompilerParams(
            dimension_semantics=("parallel",),
            vmem_limit_bytes=vmem_limit,
        ),
    )(x2d)

    out_flat = out2d.reshape(-1)
    if n_pad != n:
        out_flat = out_flat[:n]
    return out_flat.reshape(orig_shape)


if __name__ == "__main__":
    key = jax.random.PRNGKey(0)
    # NCHW input, matching the PyTorch module's expected conv-style tensor.
    x = jax.random.normal(key, (2, 4, 16, 16), dtype=jnp.float32)

    out = swish(x)
    out = jax.block_until_ready(out)

    # Reference check in plain JAX.
    ref = x * jax.nn.sigmoid(x)
    assert out.shape == x.shape and out.dtype == x.dtype
    assert jnp.max(jnp.abs(out - ref)) < 1e-5

    # Also exercise a non-divisible / padded path.
    x_odd = jax.random.normal(jax.random.PRNGKey(1), (3, 5, 7, 11), dtype=jnp.float32)
    out_odd = jax.block_until_ready(swish(x_odd))
    ref_odd = x_odd * jax.nn.sigmoid(x_odd)
    assert out_odd.shape == x_odd.shape
    assert jnp.max(jnp.abs(out_odd - ref_odd)) < 1e-5

    print("KERNEL_OK")
</pallas_src>

<mosaic_0001>
module attributes {stable_mosaic.version = 11 : i64} {
  func.func @_swish_kernel(%arg0: i32, %arg1: memref<16x128xf32, #tpu.memory_space<vmem>>, %arg2: memref<16x128xf32, #tpu.memory_space<vmem>>) attributes {dimension_semantics = [#tpu.dimension_semantics<parallel>], iteration_bounds = array<i64: 1>, scalar_prefetch = 0 : i64, scratch_operands = 0 : i64, tpu.core_type = #tpu.core_type<tc>, window_params = [{transform_indices = @transform_0, window_bounds = array<i64: 16, 128>}, {transform_indices = @transform_1, window_bounds = array<i64: 16, 128>}]} {
    %c0 = arith.constant 0 : index
    %c0_0 = arith.constant 0 : index
    %0 = vector.load %arg1[%c0, %c0_0] : memref<16x128xf32, #tpu.memory_space<vmem>>, vector<16x128xf32>
    %cst = arith.constant 0.000000e+00 : f32
    %1 = vector.broadcast %cst : f32 to vector<16x128xf32>
    %2 = arith.subf %1, %0 : vector<16x128xf32>
    %3 = math.exp %2 : vector<16x128xf32>
    %cst_1 = arith.constant 1.000000e+00 : f32
    %4 = vector.broadcast %cst_1 : f32 to vector<16x128xf32>
    %5 = arith.addf %4, %3 : vector<16x128xf32>
    %cst_2 = arith.constant 1.000000e+00 : f32
    %6 = vector.broadcast %cst_2 : f32 to vector<16x128xf32>
    %7 = arith.divf %6, %5 : vector<16x128xf32>
    %8 = arith.mulf %0, %7 : vector<16x128xf32>
    %c0_3 = arith.constant 0 : index
    %c0_4 = arith.constant 0 : index
    %9 = vector.load %arg2[%c0_3, %c0_4] : memref<16x128xf32, #tpu.memory_space<vmem>>, vector<16x128xf32>
    tpu.vector_store %arg2[%c0_3, %c0_4], %8 {strides = array<i32>} : memref<16x128xf32, #tpu.memory_space<vmem>>, vector<16x128xf32>,
    return
  }
  func.func @transform_0(%arg0: i32) -> (i32, i32) {
    %c0_i32 = arith.constant 0 : i32
    %c0_i32_0 = arith.constant 0 : i32
    return %arg0, %c0_i32 : i32, i32
  }
  func.func @transform_1(%arg0: i32) -> (i32, i32) {
    %c0_i32 = arith.constant 0 : i32
    %c0_i32_0 = arith.constant 0 : i32
    return %arg0, %c0_i32 : i32, i32
  }
}

</mosaic_0001>

<llo_original>
// kernel: tpu_custom_call.1
$region0: #{tpu_custom_call.1}
  #allocation0 [shape = 'u32[]', space=smem, size = 0x4, offset = 0x4, fixed_abs, tag = 'smem constant byte address 0x4 - core index']
  #allocation1 [shape = 'u32[144,128]{1,0:T(1,128)}', space=vmem, size = 0x12000, scoped, tag = 'internal scratch']
  %s0 = inlined_call_operand.hbm [shape: f32[16,128], index: 0, kind: input, shape index: {}]
  %s1 = inlined_call_operand.hbm [shape: f32[16,128], index: 1, kind: output, shape index: {}]
  %s2 = sld [smem:[#allocation0]]
  $region18: #{tpu_custom_call.1} parent=0
    _
  %s4 = ssub.s32 1, %s2
  %s5 = scalar_select 0, %s4, %s2
  $region1: #{tpu_custom_call.1} parent=0
    #allocation2 [shape = 'u8[8192]{0}', space=vmem, size = 0x2000, scoped, tag = 'input window, operand 0, single buffered']
    #allocation3 [shape = 's32[1]{0}', space=sflag, size = 0x4, scoped, tag = 'scoped memory for tpu_custom_call.1']
    #allocation4 [shape = 's32[1]{0}', space=sflag, size = 0x4, scoped, tag = 'scoped memory for tpu_custom_call.1']
    #allocation5 [shape = 'u8[8192]{0}', space=vmem, size = 0x2000, scoped, tag = 'output window, operand 0, single buffered']
    %6 = vsyncpa [#allocation3], 0
    %7 = vsyncpa [#allocation4], 0
    // Predicated region
    $region2: #{tpu_custom_call.1} parent=1 // pred_check
      _
    $region3: #{tpu_custom_call.1} parent=1 // pred_check_branch
      %9 = sbr.rel (0) target = $region5
    $region4: #{tpu_custom_call.1} parent=1 // pred_region
      %s11 = ssub.s32 256, 256
      %12 = vsyncadd [#allocation3], %s11
      %s13 = sshll.u32 [#allocation2], 4
      %s14 = int_to_ptr.vmem [resolvable:$true] %s13
      %19 = dma.hbm_to_vmem [thread:$0]  %s0, 256, %s14, [#allocation3], 128, 128, 8
    $region5: #{tpu_custom_call.1} parent=1 // pred_fallthru
      _
    // Predicated region
    $region6: #{tpu_custom_call.1} parent=1 // pred_check
      _
    $region7: #{tpu_custom_call.1} parent=1 // pred_check_branch
      %21 = sbr.rel (0) target = $region9
    $region8: #{tpu_custom_call.1} parent=1 // pred_region
      %22 = dma.done [#allocation3], 256
    $region9: #{tpu_custom_call.1} parent=1 // pred_fallthru
      _
    %v23 = vld [vmem:[#allocation2] sm:$0xff]
    %v24 = vld [vmem:[#allocation2 + $0x8] sm:$0xff]
    %v25 = vsub.f32 0.0, %v23
    %v26 = vsub.f32 0.0, %v24
    %v27 = vmul.f32 %v25, 1.442695
    %v28 = vpow.pop %v27
    %v29 = vmul.f32 %v26, 1.442695
    %v30 = vpow.pop %v29
    %v31 = vadd.f32 %v28, 1.0
    %v32 = vadd.f32 %v30, 1.0
    %v33 = vrcp.pop %v31
    %v34 = vmul.f32 1.0, %v33
    %v35 = vrcp.pop %v32
    %v36 = vmul.f32 1.0, %v35
    %v37 = vmul.f32 %v23, %v34
    %v38 = vmul.f32 %v24, %v36
    %39 = vst [vmem:[#allocation5] sm:$0xff] %v37
    %40 = vst [vmem:[#allocation5 + $0x8] sm:$0xff] %v38
    // Predicated region
    $region10: #{tpu_custom_call.1} parent=1 // pred_check
      _
    $region11: #{tpu_custom_call.1} parent=1 // pred_check_branch
      %42 = sbr.rel (0) target = $region13
    $region12: #{tpu_custom_call.1} parent=1 // pred_region
      %s44 = ssub.s32 256, 256
      %45 = vsyncadd [#allocation4], %s44
      %s46 = sshll.u32 [#allocation5], 4
      %s47 = int_to_ptr.vmem [resolvable:$true] %s46
      %52 = dma.vmem_to_hbm [thread:$0]  %s47, 256, %s1, [#allocation4], 128, 128, 8
    $region13: #{tpu_custom_call.1} parent=1 // pred_fallthru
      _
    // Predicated region
    $region14: #{tpu_custom_call.1} parent=1 // pred_check
      _
    $region15: #{tpu_custom_call.1} parent=1 // pred_check_branch
      %54 = sbr.rel (0) target = $region17
    $region16: #{tpu_custom_call.1} parent=1 // pred_region
      %55 = dma.done [#allocation4], 256
    $region17: #{tpu_custom_call.1} parent=1 // pred_fallthru
      _
    %56 = vsyncpa [#allocation3], 1
    %57 = vsyncpa [#allocation4], 1

</llo_original>
